<compile_context>
chip_gen: v6e
topology: v6e:2x2x1
jax: 0.10.0
libtpu: 0.0.40
codegen_flags: <defaults>
</compile_context>

<pallas_src>
import jax
import jax.numpy as jnp
from jax.experimental import pallas as pl
from jax.experimental.pallas import tpu as pltpu

_COLOR_OFFSET = 4   # color1..color3 live at feature indices 4:7
_NUM_COLORS = 3


def _color_kernel(zt_ref, at_ref, out_ref):
    # zt_ref : (D, TB)  — features on sublanes, batch on lanes
    # at_ref : (3, TB)  — one-hot color weights
    # out_ref: (1, TB)  — lane-dense output row
    z_color = zt_ref[pl.ds(_COLOR_OFFSET, _NUM_COLORS), :]          # (3, TB)
    a = at_ref[...]                                                 # (3, TB)
    out_ref[...] = jnp.sum(a * z_color, axis=0,
                           keepdims=True).astype(out_ref.dtype)     # (1, TB)


def _round_up(x, m):
    return ((x + m - 1) // m) * m


def yolo_color(z, a, *, tile_b=512):
    """(a * z[:, 4:7]).sum(axis=1) computed with a Pallas TPU kernel."""
    z = jnp.asarray(z, jnp.float32)
    a = jnp.asarray(a, jnp.float32)
    B, D = z.shape
    assert D >= _COLOR_OFFSET + _NUM_COLORS, "feature dim too small"
    assert a.shape == (B, _NUM_COLORS)

    # Batch tile: multiple of 128 (lane width); capped so tiles stay tiny.
    tb = min(tile_b, _round_up(B, 128))
    b_pad = _round_up(B, tb)

    # Layout plumbing: batch on the lane axis, zero-pad up to the tile size.
    z_t = jnp.pad(jnp.transpose(z), ((0, 0), (0, b_pad - B)))   # (D, b_pad)
    a_t = jnp.pad(jnp.transpose(a), ((0, 0), (0, b_pad - B)))   # (3, b_pad)

    out = pl.pallas_call(
        _color_kernel,
        out_shape=jax.ShapeDtypeStruct((1, b_pad), jnp.float32),
        grid=(b_pad // tb,),
        in_specs=[
            pl.BlockSpec((D, tb), lambda i: (0, i)),
            pl.BlockSpec((_NUM_COLORS, tb), lambda i: (0, i)),
        ],
        out_specs=pl.BlockSpec((1, tb), lambda i: (0, i)),
        compiler_params=pltpu.CompilerParams(
            dimension_semantics=("parallel",)),
    )(z_t, a_t)
    return out[0, :B]


def _reference(z, a):
    return jnp.sum(a * z[:, _COLOR_OFFSET:_COLOR_OFFSET + _NUM_COLORS], axis=1)


if __name__ == "__main__":
    key = jax.random.PRNGKey(0)
    k1, k2, k3 = jax.random.split(key, 3)

    # Small YOLO-style batch: B objects x 11 features.
    B, D = 8, 11
    z = jax.random.uniform(k1, (B, D), dtype=jnp.float32)
    a = jnp.broadcast_to(
        jax.nn.one_hot(1, _NUM_COLORS, dtype=jnp.float32), (B, _NUM_COLORS))

    out = yolo_color(z, a)
    jax.block_until_ready(out)
    ref = _reference(z, a)
    assert out.shape == (B,)
    assert jnp.allclose(out, ref, atol=1e-6, rtol=1e-6), (out, ref)

    # Larger batch exercising the multi-tile grid and padding path.
    B2 = 1030
    z2 = jax.random.uniform(k2, (B2, D), dtype=jnp.float32)
    idx = jax.random.randint(k3, (B2,), 0, _NUM_COLORS)
    a2 = jax.nn.one_hot(idx, _NUM_COLORS, dtype=jnp.float32)
    out2 = yolo_color(z2, a2)
    jax.block_until_ready(out2)
    assert jnp.allclose(out2, _reference(z2, a2), atol=1e-6, rtol=1e-6)

    print("KERNEL_OK")
</pallas_src>

<mosaic_0001>
module attributes {stable_mosaic.version = 11 : i64} {
  func.func @_color_kernel(%arg0: i32, %arg1: memref<11x128xf32, #tpu.memory_space<vmem>>, %arg2: memref<3x128xf32, #tpu.memory_space<vmem>>, %arg3: memref<1x128xf32, #tpu.memory_space<vmem>>) attributes {dimension_semantics = [#tpu.dimension_semantics<parallel>], iteration_bounds = array<i64: 1>, scalar_prefetch = 0 : i64, scratch_operands = 0 : i64, tpu.core_type = #tpu.core_type<tc>, window_params = [{transform_indices = @transform_0, window_bounds = array<i64: 11, 128>}, {transform_indices = @transform_1, window_bounds = array<i64: 3, 128>}, {transform_indices = @transform_2, window_bounds = array<i64: 1, 128>}]} {
    %c4 = arith.constant 4 : index
    %c0 = arith.constant 0 : index
    %0 = vector.load %arg1[%c4, %c0] : memref<11x128xf32, #tpu.memory_space<vmem>>, vector<3x128xf32>
    %c0_0 = arith.constant 0 : index
    %c0_1 = arith.constant 0 : index
    %1 = vector.load %arg2[%c0_0, %c0_1] : memref<3x128xf32, #tpu.memory_space<vmem>>, vector<3x128xf32>
    %2 = arith.mulf %1, %0 : vector<3x128xf32>
    %cst = arith.constant dense<0.000000e+00> : vector<128xf32>
    %3 = vector.multi_reduction <add>, %2, %cst [0] : vector<3x128xf32> to vector<128xf32>
    %4 = vector.shape_cast %3 : vector<128xf32> to vector<1x128xf32>
    %c0_2 = arith.constant 0 : index
    %c0_3 = arith.constant 0 : index
    %5 = vector.load %arg3[%c0_2, %c0_3] : memref<1x128xf32, #tpu.memory_space<vmem>>, vector<1x128xf32>
    tpu.vector_store %arg3[%c0_2, %c0_3], %4 {strides = array<i32>} : memref<1x128xf32, #tpu.memory_space<vmem>>, vector<1x128xf32>,
    return
  }
  func.func @transform_0(%arg0: i32) -> (i32, i32) {
    %c0_i32 = arith.constant 0 : i32
    %c0_i32_0 = arith.constant 0 : i32
    return %c0_i32, %arg0 : i32, i32
  }
  func.func @transform_1(%arg0: i32) -> (i32, i32) {
    %c0_i32 = arith.constant 0 : i32
    %c0_i32_0 = arith.constant 0 : i32
    return %c0_i32, %arg0 : i32, i32
  }
  func.func @transform_2(%arg0: i32) -> (i32, i32) {
    %c0_i32 = arith.constant 0 : i32
    %c0_i32_0 = arith.constant 0 : i32
    return %c0_i32, %arg0 : i32, i32
  }
}

</mosaic_0001>

<llo_original>
// kernel: tpu_custom_call.1
$region0: #{tpu_custom_call.1}
  #allocation0 [shape = 'u32[]', space=smem, size = 0x4, offset = 0x4, fixed_abs, tag = 'smem constant byte address 0x4 - core index']
  #allocation1 [shape = 'u32[144,128]{1,0:T(1,128)}', space=vmem, size = 0x12000, scoped, tag = 'internal scratch']
  %s0 = inlined_call_operand.hbm [shape: f32[11,128], index: 0, kind: input, shape index: {}]
  %s1 = inlined_call_operand.hbm [shape: f32[3,128], index: 1, kind: input, shape index: {}]
  %s2 = inlined_call_operand.hbm [shape: f32[1,128], index: 2, kind: output, shape index: {}]
  %s3 = sld [smem:[#allocation0]]
  $region26: #{tpu_custom_call.1} parent=0
    _
  %s5 = ssub.s32 1, %s3
  %s6 = scalar_select 0, %s5, %s3
  $region1: #{tpu_custom_call.1} parent=0
    #allocation2 [shape = 'u8[8192]{0}', space=vmem, size = 0x2000, scoped, tag = 'input window, operand 0, single buffered']
    #allocation3 [shape = 's32[1]{0}', space=sflag, size = 0x4, scoped, tag = 'scoped memory for tpu_custom_call.1']
    #allocation4 [shape = 's32[1]{0}', space=sflag, size = 0x4, scoped, tag = 'scoped memory for tpu_custom_call.1']
    #allocation5 [shape = 'u8[2048]{0}', space=vmem, size = 0x800, scoped, tag = 'input window, operand 1, single buffered']
    #allocation6 [shape = 's32[1]{0}', space=sflag, size = 0x4, scoped, tag = 'scoped memory for tpu_custom_call.1']
    #allocation7 [shape = 'u8[512]{0}', space=vmem, size = 0x400, scoped, tag = 'output window, operand 0, single buffered']
    %7 = vsyncpa [#allocation3], 0
    %8 = vsyncpa [#allocation6], 0
    %9 = vsyncpa [#allocation4], 0
    // Predicated region
    $region2: #{tpu_custom_call.1} parent=1 // pred_check
      _
    $region3: #{tpu_custom_call.1} parent=1 // pred_check_branch
      %11 = sbr.rel (0) target = $region5
    $region4: #{tpu_custom_call.1} parent=1 // pred_region
      %s13 = ssub.s32 256, 256
      %14 = vsyncadd [#allocation3], %s13
      %s15 = sshll.u32 [#allocation2], 4
      %s16 = int_to_ptr.vmem [resolvable:$true] %s15
      %21 = dma.hbm_to_vmem [thread:$0]  %s0, 256, %s16, [#allocation3], 128, 128, 8
    $region5: #{tpu_custom_call.1} parent=1 // pred_fallthru
      _
    // Predicated region
    $region6: #{tpu_custom_call.1} parent=1 // pred_check
      _
    $region7: #{tpu_custom_call.1} parent=1 // pred_check_branch
      %23 = sbr.rel (0) target = $region9
    $region8: #{tpu_custom_call.1} parent=1 // pred_region
      %s25 = ssub.s32 64, 64
      %26 = vsyncadd [#allocation6], %s25
      %s28 = sshll.u32 [#allocation5], 4
      %s29 = int_to_ptr.vmem [resolvable:$true] %s28
      %31 = dma.hbm_to_vmem [thread:$0]  %s1, 64, %s29, [#allocation6]
    $region9: #{tpu_custom_call.1} parent=1 // pred_fallthru
      _
    // Predicated region
    $region10: #{tpu_custom_call.1} parent=1 // pred_check
      _
    $region11: #{tpu_custom_call.1} parent=1 // pred_check_branch
      %33 = sbr.rel (0) target = $region13
    $region12: #{tpu_custom_call.1} parent=1 // pred_region
      %34 = dma.done [#allocation3], 256
    $region13: #{tpu_custom_call.1} parent=1 // pred_fallthru
      _
    // Predicated region
    $region14: #{tpu_custom_call.1} parent=1 // pred_check
      _
    $region15: #{tpu_custom_call.1} parent=1 // pred_check_branch
      %36 = sbr.rel (0) target = $region17
    $region16: #{tpu_custom_call.1} parent=1 // pred_region
      %37 = dma.done [#allocation6], 64
    $region17: #{tpu_custom_call.1} parent=1 // pred_fallthru
      _
    %v38 = vld [vmem:[#allocation2 + $0x4] sm:$0x7]
    %v39 = vld [vmem:[#allocation5] sm:$0x7]
    %v40 = vmul.f32 %v39, %v38
    %vm41 = vcmask 1042432
    %v42 = vsel %vm41, %v40, 0.0
    %v43 = vrot.slane %v42, 4
    %v44 = vadd.f32 %v42, %v43
    %v45 = vrot.slane %v44, 2
    %v46 = vadd.f32 %v44, %v45
    %v47 = vrot.slane %v46, 1
    %v48 = vadd.f32 %v46, %v47
    %49 = vst [vmem:[#allocation7] sm:$0x1] %v48
    // Predicated region
    $region18: #{tpu_custom_call.1} parent=1 // pred_check
      _
    $region19: #{tpu_custom_call.1} parent=1 // pred_check_branch
      %51 = sbr.rel (0) target = $region21
    $region20: #{tpu_custom_call.1} parent=1 // pred_region
      %s53 = ssub.s32 16, 16
      %54 = vsyncadd [#allocation4], %s53
      %s56 = sshll.u32 [#allocation7], 4
      %s57 = int_to_ptr.vmem [resolvable:$true] %s56
      %59 = dma.vmem_to_hbm [thread:$0]  %s57, 16, %s2, [#allocation4]
    $region21: #{tpu_custom_call.1} parent=1 // pred_fallthru
      _
    // Predicated region
    $region22: #{tpu_custom_call.1} parent=1 // pred_check
      _
    $region23: #{tpu_custom_call.1} parent=1 // pred_check_branch
      %61 = sbr.rel (0) target = $region25
    $region24: #{tpu_custom_call.1} parent=1 // pred_region
      %62 = dma.done [#allocation4], 16
    $region25: #{tpu_custom_call.1} parent=1 // pred_fallthru
      _
    %63 = vsyncpa [#allocation3], 1
    %64 = vsyncpa [#allocation6], 1
    %65 = vsyncpa [#allocation4], 1

</llo_original>
